<compile_context>
chip_gen: v6e
topology: v6e:2x2x1
jax: 0.10.0
libtpu: 0.0.40
codegen_flags: <defaults>
</compile_context>

<pallas_src>
import math

import jax
import jax.numpy as jnp
from jax.experimental import pallas as pl
from jax.experimental.pallas import tpu as pltpu

INNER_DIM = 128   # Conv2d(inner_dim, 24, 1) input channels (module default)
NUM_CLS = 24      # Conv2d output channels

_VMEM_TILE_BUDGET = 24 * 1024 * 1024   # headroom under v7x's 32 MiB scoped VMEM
_VMEM_LIMIT_BYTES = 32 * 1024 * 1024


def _conv1x1_kernel(w_ref, b_ref, x_ref, o_ref):
    # w_ref: (C_out, C_in)  resident weight (bf16 when x is bf16 -> native MXU path)
    # b_ref: (C_out, 1)     resident f32 bias column (broadcast over spatial)
    # x_ref: (C_in, thw)    one batch element's spatial tile, channels-major
    # o_ref: (C_out, thw)   lane-dense output tile (NCHW layout)
    acc = jnp.dot(w_ref[...], x_ref[...], preferred_element_type=jnp.float32)
    o_ref[...] = (acc + b_ref[...]).astype(o_ref.dtype)


def _tensorcores_per_chip():
    """Best-effort TensorCores-per-chip count (2 on v7x / megacore, else 1)."""
    try:
        info = pltpu.get_tpu_info()
        for attr in ("num_cores", "num_tensorcores", "tensorcores_per_chip"):
            n = getattr(info, attr, None)
            if isinstance(n, int) and n >= 1:
                return n
    except Exception:
        pass
    try:
        dev = jax.devices()[0]
        n = getattr(dev, "num_cores", None)
        if isinstance(n, int) and n >= 1:
            return n
        kind = str(getattr(dev, "device_kind", "")).lower()
        if "v7" in kind:
            return 2
    except Exception:
        pass
    return 1


def cls_pred_conv_pallas(x_nchw, weight, bias, *, target_thw=8192):
    """1x1 conv (NCHW in / NCHW out) via a Pallas matmul kernel.

    x_nchw : [B, C_in, H, W]   (f32 or bf16; MXU accumulates in f32)
    weight : [C_out, C_in]     (squeezed 1x1 conv kernel)
    bias   : [C_out]
    returns: [B, C_out, H, W]
    """
    B, C, H, W = x_nchw.shape
    C_out = weight.shape[0]
    HW = H * W

    # Native bf16 MXU path: avoid f32-promoted multi-pass matmuls when the
    # activations are bf16.  Bias stays f32 (added to the f32 accumulator).
    if x_nchw.dtype == jnp.bfloat16 and weight.dtype != jnp.bfloat16:
        weight = weight.astype(jnp.bfloat16)
    bias_col = bias.astype(jnp.float32).reshape(C_out, 1)

    itemsize = jnp.dtype(x_nchw.dtype).itemsize
    w_itemsize = jnp.dtype(weight.dtype).itemsize

    # --- Spatial tile selection -------------------------------------------
    # Cap: double-buffered x tile + output tile must stay under the budget.
    col_bytes = 2 * (C * itemsize + C_out * itemsize)
    vmem_cap_thw = max(512, ((_VMEM_TILE_BUDGET // col_bytes) // 128) * 128)
    # Floor at 512 so strided x-tile DMAs keep >= 2 KiB per channel row.
    target = max(512, (int(target_thw) // 128) * 128)
    target = min(target, vmem_cap_thw)

    if HW <= target:
        thw = HW  # full extent: contiguous DMA, always a legal block shape
        # Dual-TensorCore chips (v7x / megacore): with B == 1 and one spatial
        # tile the grid would be (1, 1) and a core idles.  Split the spatial
        # axis so both cores get work (skip tiny HW: not worth the overhead).
        if B == 1 and HW >= 1024 and _tensorcores_per_chip() > 1:
            half = (HW + 1) // 2
            thw = max(512, ((half + 127) // 128) * 128)
    else:
        thw = target

    grid = (B, pl.cdiv(HW, thw))

    # NCHW -> [B, C, H*W]: a pure view, no transpose / extra HBM pass.
    x3 = x_nchw.reshape(B, C, HW)

    cost = pl.CostEstimate(
        flops=2 * B * C_out * C * HW,
        transcendentals=0,
        bytes_accessed=(B * HW * C * itemsize          # x read
                        + B * HW * C_out * itemsize    # out write
                        + C_out * C * w_itemsize       # weight
                        + C_out * 4),                  # bias
    )

    out3 = pl.pallas_call(
        _conv1x1_kernel,
        out_shape=jax.ShapeDtypeStruct((B, C_out, HW), x_nchw.dtype),
        grid_spec=pltpu.PrefetchScalarGridSpec(
            num_scalar_prefetch=0,
            grid=grid,
            in_specs=[
                # Constant index_map -> weight/bias DMA'd once, stay resident.
                pl.BlockSpec((C_out, C), lambda b, j: (0, 0)),
                pl.BlockSpec((C_out, 1), lambda b, j: (0, 0)),
                # Batch dim squeezed out of the kernel view.
                pl.BlockSpec((None, C, thw), lambda b, j: (b, 0, j)),
            ],
            out_specs=pl.BlockSpec((None, C_out, thw), lambda b, j: (b, 0, j)),
        ),
        compiler_params=pltpu.CompilerParams(
            # Both axes independent -> shard across TensorCores where present.
            dimension_semantics=("parallel", "parallel"),
            # Explicit limit: above v5e's 16 MiB scoped default, within v7x's
            # 32 MiB scoped / 64 MiB physical budget.
            vmem_limit_bytes=_VMEM_LIMIT_BYTES,
        ),
        cost_estimate=cost,
    )(weight, bias_col, x3)

    # [B, C_out, H*W] -> [B, C_out, H, W]: pure view, no data movement.
    return out3.reshape(B, C_out, H, W)


def dtsu_forward(x, weight, bias):
    """DTSU.forward with identity encoder/decoder."""
    feat_list = x            # encoder(x, mask=None) -> identity
    final_feat = feat_list   # decoder(feat_list)    -> identity
    logit1 = cls_pred_conv_pallas(final_feat, weight, bias)
    return logit1


def init_params(key, c_in=INNER_DIM, c_out=NUM_CLS):
    """Deterministic kaiming-normal-style init for the 1x1 conv (fan_in = c_in)."""
    kw, _ = jax.random.split(key)
    std = math.sqrt(2.0 / c_in)
    weight = jax.random.normal(kw, (c_out, c_in), dtype=jnp.float32) * std
    bias = jnp.zeros((c_out,), dtype=jnp.float32)
    return weight, bias


def _ref_conv(x, weight, bias):
    return (jnp.einsum("bchw,oc->bohw", x.astype(jnp.float32),
                       weight.astype(jnp.float32))
            + bias.astype(jnp.float32)[None, :, None, None])


if __name__ == "__main__":
    key = jax.random.PRNGKey(0)
    k_x, k_p = jax.random.split(key)

    weight, bias = init_params(k_p)

    # 1) Basic f32 path (spec-like small shapes).
    B, C, H, W = 2, INNER_DIM, 16, 16
    x = jax.random.normal(k_x, (B, C, H, W), dtype=jnp.float32)
    out = jax.block_until_ready(dtsu_forward(x, weight, bias))
    ref = _ref_conv(x, weight, bias)
    assert out.shape == (B, NUM_CLS, H, W), out.shape
    assert jnp.allclose(out, ref, atol=1e-4, rtol=1e-4)

    # 2) Non-tile-friendly spatial size (full-extent block, HW=100).
    B2, H2, W2 = 2, 10, 10
    x2 = jax.random.normal(k_x, (B2, C, H2, W2), dtype=jnp.float32)
    out2 = jax.block_until_ready(dtsu_forward(x2, weight, bias))
    ref2 = _ref_conv(x2, weight, bias)
    assert out2.shape == (B2, NUM_CLS, H2, W2), out2.shape
    assert jnp.allclose(out2, ref2, atol=1e-4, rtol=1e-4)

    # 3) B == 1 with larger HW: exercises the dual-TensorCore spatial split
    #    (grid (1, 2)) on v7x-class chips; falls back to a single tile elsewhere.
    B3, H3, W3 = 1, 32, 64
    x3 = jax.random.normal(k_x, (B3, C, H3, W3), dtype=jnp.float32)
    out3 = jax.block_until_ready(dtsu_forward(x3, weight, bias))
    ref3 = _ref_conv(x3, weight, bias)
    assert out3.shape == (B3, NUM_CLS, H3, W3), out3.shape
    assert jnp.allclose(out3, ref3, atol=1e-4, rtol=1e-4)

    # 4) bf16 activation path: weight is cast to bf16 inside the wrapper so
    #    the MXU runs the native bf16 path with f32 accumulation.
    x4 = x.astype(jnp.bfloat16)
    out4 = jax.block_until_ready(dtsu_forward(x4, weight, bias))
    ref4 = _ref_conv(x4, weight.astype(jnp.bfloat16), bias).astype(jnp.bfloat16)
    assert out4.shape == (B, NUM_CLS, H, W), out4.shape
    assert out4.dtype == jnp.bfloat16
    assert jnp.allclose(out4.astype(jnp.float32), ref4.astype(jnp.float32),
                        atol=2e-2, rtol=2e-2)

    print("KERNEL_OK")
</pallas_src>

<mosaic_0001>
module attributes {stable_mosaic.version = 11 : i64} {
  func.func @_conv1x1_kernel(%arg0: i32, %arg1: i32, %arg2: memref<24x128xf32, #tpu.memory_space<vmem>>, %arg3: memref<24x1xf32, #tpu.memory_space<vmem>>, %arg4: memref<1x128x256xf32, #tpu.memory_space<vmem>>, %arg5: memref<1x24x256xf32, #tpu.memory_space<vmem>>) attributes {dimension_semantics = [#tpu.dimension_semantics<parallel>, #tpu.dimension_semantics<parallel>], iteration_bounds = array<i64: 2, 1>, scalar_prefetch = 0 : i64, scratch_operands = 0 : i64, tpu.core_type = #tpu.core_type<tc>, window_params = [{pipeline_mode = #tpu.pipeline_mode<synchronous>, transform_indices = @transform_0, window_bounds = array<i64: 24, 128>}, {pipeline_mode = #tpu.pipeline_mode<synchronous>, transform_indices = @transform_1, window_bounds = array<i64: 24, 1>}, {transform_indices = @transform_2, window_bounds = array<i64: 1, 128, 256>}, {transform_indices = @transform_3, window_bounds = array<i64: 1, 24, 256>}]} {
    %c0 = arith.constant 0 : index
    %c0_0 = arith.constant 0 : index
    %0 = vector.load %arg2[%c0, %c0_0] : memref<24x128xf32, #tpu.memory_space<vmem>>, vector<24x128xf32>
    %c0_1 = arith.constant 0 : index
    %c0_2 = arith.constant 0 : index
    %c0_3 = arith.constant 0 : index
    %1 = vector.load %arg4[%c0_1, %c0_2, %c0_3] : memref<1x128x256xf32, #tpu.memory_space<vmem>>, vector<1x128x256xf32>
    %2 = vector.shape_cast %1 : vector<1x128x256xf32> to vector<128x256xf32>
    %cst = arith.constant dense<0.000000e+00> : vector<24x256xf32>
    %3 = tpu.matmul %0, %2, %cst {dimension_numbers = #tpu.dot_dimension_numbers<[1], [0], [0], [1], [0, 0, 1, 1], [], []>} : vector<24x128xf32>, vector<128x256xf32>, vector<24x256xf32> -> vector<24x256xf32>
    %c0_4 = arith.constant 0 : index
    %c0_5 = arith.constant 0 : index
    %4 = vector.load %arg3[%c0_4, %c0_5] : memref<24x1xf32, #tpu.memory_space<vmem>>, vector<24x1xf32>
    %5 = vector.broadcast %4 : vector<24x1xf32> to vector<24x256xf32>
    %6 = arith.addf %3, %5 : vector<24x256xf32>
    %c0_6 = arith.constant 0 : index
    %c0_7 = arith.constant 0 : index
    %c0_8 = arith.constant 0 : index
    %7 = vector.load %arg5[%c0_6, %c0_7, %c0_8] : memref<1x24x256xf32, #tpu.memory_space<vmem>>, vector<1x24x256xf32>
    %8 = vector.shape_cast %7 : vector<1x24x256xf32> to vector<24x256xf32>
    %9 = vector.shape_cast %6 : vector<24x256xf32> to vector<1x24x256xf32>
    tpu.vector_store %arg5[%c0_6, %c0_7, %c0_8], %9 {strides = array<i32>} : memref<1x24x256xf32, #tpu.memory_space<vmem>>, vector<1x24x256xf32>,
    return
  }
  func.func @transform_0(%arg0: i32, %arg1: i32) -> (i32, i32) {
    %c0_i32 = arith.constant 0 : i32
    %c0_i32_0 = arith.constant 0 : i32
    %c0_i32_1 = arith.constant 0 : i32
    return %c0_i32, %c0_i32_0 : i32, i32
  }
  func.func @transform_1(%arg0: i32, %arg1: i32) -> (i32, i32) {
    %c0_i32 = arith.constant 0 : i32
    %c0_i32_0 = arith.constant 0 : i32
    %c0_i32_1 = arith.constant 0 : i32
    return %c0_i32, %c0_i32_0 : i32, i32
  }
  func.func @transform_2(%arg0: i32, %arg1: i32) -> (i32, i32, i32) {
    %c0_i32 = arith.constant 0 : i32
    %c0_i32_0 = arith.constant 0 : i32
    return %arg0, %c0_i32, %arg1 : i32, i32, i32
  }
  func.func @transform_3(%arg0: i32, %arg1: i32) -> (i32, i32, i32) {
    %c0_i32 = arith.constant 0 : i32
    %c0_i32_0 = arith.constant 0 : i32
    return %arg0, %c0_i32, %arg1 : i32, i32, i32
  }
}

</mosaic_0001>

<llo_original>
// kernel: tpu_custom_call.1
$region0: #{tpu_custom_call.1}
  #allocation0 [shape = 'u32[]', space=smem, size = 0x4, offset = 0x4, fixed_abs, tag = 'smem constant byte address 0x4 - core index']
  #allocation1 [shape = 'u32[144,128]{1,0:T(1,128)}', space=vmem, size = 0x12000, scoped, tag = 'internal scratch']
  %s0 = inlined_call_operand.vmem [shape: f32[24,128], index: 0, kind: input, shape index: {}]
  %s1 = inlined_call_operand.vmem [shape: f32[24,1], index: 1, kind: input, shape index: {}]
  %s2 = inlined_call_operand.hbm [shape: f32[2,128,256], index: 2, kind: input, shape index: {}]
  %s3 = inlined_call_operand.hbm [shape: f32[2,24,256], index: 3, kind: output, shape index: {}]
  %s4 = sld [smem:[#allocation0]]
  $region49: #{tpu_custom_call.1} parent=0
    _
  %s6 = ssub.s32 1, %s4
  %s7 = scalar_select 0, %s6, %s4
  $region1: #{tpu_custom_call.1} parent=0
    #allocation2 [shape = 'u8[262144]{0}', space=vmem, size = 0x40000, scoped, tag = 'input window, operand 2']
    #allocation3 [shape = 's32[2]{0}', space=sflag, size = 0x8, scoped, tag = 'scoped memory for tpu_custom_call.1']
    #allocation4 [shape = 's32[2]{0}', space=sflag, size = 0x8, scoped, tag = 'scoped memory for tpu_custom_call.1']
    #allocation5 [shape = 'u8[49152]{0}', space=vmem, size = 0xc000, scoped, tag = 'output window, operand 0']
    %8 = vsyncpa [#allocation3], 0
    %s9 = scalar_lea.sflag [#allocation3], 1
    %10 = vsyncpa %s9, 0
    %11 = vsyncpa [#allocation4], 0
    %s12 = scalar_lea.sflag [#allocation4], 1
    %13 = vsyncpa %s12, 0
    loop: start=0, step=1, limit=4
    $region2: #{tpu_custom_call.1} parent=1 // loop_pre_header
      _
    $region3: #{tpu_custom_call.1} parent=1 // loop_header
      %s15 = sphi 0, %s19
      %p16 = scmp.ge.s32.totalorder %s15, 4
      %s22 = sphi 0, %s34
      %s23 = sphi 0, %s30
      %s24 = sphi 0, %s22
      %s25 = sphi 0, %s23
      %s26 = sphi 0, %s24
      %s27 = sphi 0, %s25
      %s35 = sphi 0, %s35
      %s37 = sphi 0, %s35
      %s38 = sphi 0, %s37
      %s52 = sphi 0, %s38
      %s56 = sphi 0, %s56
      %s58 = sphi 0, %s56
      %s59 = sphi 0, %s58
      %s73 = sphi 0, %s59
      %s81 = sphi 0, %s83
      %s84 = sphi 0, %s81
      %s85 = sphi 0, %s84
      %s101 = sphi 0, %s85
      %s109 = sphi 0, %s111
      %s112 = sphi 0, %s109
      %s113 = sphi 0, %s112
      %s129 = sphi 0, %s113
    $region4: #{tpu_custom_call.1} parent=1 // loop_header_branch
      %18 = sbr.rel (%p16) target = $region8
    $region5: #{tpu_custom_call.1} parent=1 // loop_body
      %s20 = ssub.s32 %s15, 1
      %s21 = ssub.s32 %s15, 2
      %s28 = sadd.s32 1, %s23
      %p29 = scmp.ge.s32.totalorder %s28, 1
      %s30 = scalar_select %p29, 0, %s28
      %s31 = sadd.s32 1, %s22
      %s32 = scalar_select %p29, %s31, %s22
      %p33 = scmp.ge.s32.totalorder %s32, 2
      %s34 = scalar_select %p33, 0, %s32
      %s36 = sadd.s32 %s35, 1
      %p39 = scmp.eq.s32.totalorder %s15, 1
      %p40 = scmp.ne.s32.totalorder %s35, %s37
      %p41 = scmp.eq.s32.totalorder %s15, 0
      %p42 = por %p40, %p41
      %p43 = scmp.ne.s32.totalorder %s35, %s37
      %p44 = scmp.eq.s32.totalorder %s20, 1
      %p45 = por %p43, %p44
      %p46 = scmp.ne.s32.totalorder %s37, %s38
      %p47 = scmp.eq.s32.totalorder %s20, 0
      %p48 = por %p46, %p47
      %p49 = scmp.ne.s32.totalorder %s37, %s38
      %p50 = scmp.eq.s32.totalorder %s21, 1
      %p51 = por %p49, %p50
      %p53 = scmp.ne.s32.totalorder %s38, %s52
      %p54 = scmp.eq.s32.totalorder %s21, 0
      %p55 = por %p53, %p54
      %s57 = sadd.s32 %s56, 1
      %p60 = scmp.eq.s32.totalorder %s15, 1
      %p61 = scmp.ne.s32.totalorder %s56, %s58
      %p62 = scmp.eq.s32.totalorder %s15, 0
      %p63 = por %p61, %p62
      %p64 = scmp.ne.s32.totalorder %s56, %s58
      %p65 = scmp.eq.s32.totalorder %s20, 1
      %p66 = por %p64, %p65
      %p67 = scmp.ne.s32.totalorder %s58, %s59
      %p68 = scmp.eq.s32.totalorder %s20, 0
      %p69 = por %p67, %p68
      %p70 = scmp.ne.s32.totalorder %s58, %s59
      %p71 = scmp.eq.s32.totalorder %s21, 1
      %p72 = por %p70, %p71
      %p74 = scmp.ne.s32.totalorder %s59, %s73
      %p75 = scmp.eq.s32.totalorder %s21, 0
      %p76 = por %p74, %p75
      %s77 = ssub.s32 %s22, %s34
      %s78 = ssub.s32 %s23, %s30
      %s79 = sor.u32 %s77, %s78
      %p80 = scmp.eq.s32.totalorder %s79, 0
      %s82 = sadd.s32 %s81, 1
      %s83 = scalar_select %p80, %s81, %s82
      %p86 = pneg %p80
      %p87 = scmp.eq.s32.totalorder %s15, 1
      %p88 = por %p86, %p87
      %p89 = scmp.ne.s32.totalorder %s81, %s84
      %p90 = scmp.eq.s32.totalorder %s15, 0
      %p91 = por %p89, %p90
      %p92 = scmp.ne.s32.totalorder %s81, %s84
      %p93 = scmp.eq.s32.totalorder %s20, 1
      %p94 = por %p92, %p93
      %p95 = scmp.ne.s32.totalorder %s84, %s85
      %p96 = scmp.eq.s32.totalorder %s20, 0
      %p97 = por %p95, %p96
      %p98 = scmp.ne.s32.totalorder %s84, %s85
      %p99 = scmp.eq.s32.totalorder %s21, 1
      %p100 = por %p98, %p99
      %p102 = scmp.ne.s32.totalorder %s85, %s101
      %p103 = scmp.eq.s32.totalorder %s21, 0
      %p104 = por %p102, %p103
      %s105 = ssub.s32 %s22, %s34
      %s106 = ssub.s32 %s23, %s30
      %s107 = sor.u32 %s105, %s106
      %p108 = scmp.eq.s32.totalorder %s107, 0
      %s110 = sadd.s32 %s109, 1
      %s111 = scalar_select %p108, %s109, %s110
      %p114 = pneg %p108
      %p115 = scmp.eq.s32.totalorder %s15, 1
      %p116 = por %p114, %p115
      %p117 = scmp.ne.s32.totalorder %s109, %s112
      %p118 = scmp.eq.s32.totalorder %s15, 0
      %p119 = por %p117, %p118
      %p120 = scmp.ne.s32.totalorder %s109, %s112
      %p121 = scmp.eq.s32.totalorder %s20, 1
      %p122 = por %p120, %p121
      %p123 = scmp.ne.s32.totalorder %s112, %s113
      %p124 = scmp.eq.s32.totalorder %s20, 0
      %p125 = por %p123, %p124
      %p126 = scmp.ne.s32.totalorder %s112, %s113
      %p127 = scmp.eq.s32.totalorder %s21, 1
      %p128 = por %p126, %p127
      %p130 = scmp.ne.s32.totalorder %s113, %s129
      %p131 = scmp.eq.s32.totalorder %s21, 0
      %p132 = por %p130, %p131
      %p133 = scmp.le.s32.totalorder 1, %s15
      %p134 = scmp.lt.s32.totalorder %s15, 3
      %p135 = pnand %p133, %p134
      %p136 = pneg %p135
      // Predicated region
      $region9: #{tpu_custom_call.1} parent=5 // pred_check
        _
      $region10: #{tpu_custom_call.1} parent=5 // pred_check_branch
        %138 = sbr.rel (%p135) target = $region12
      $region11: #{tpu_custom_call.1} parent=5 // pred_region
        %s139 = ssub.s32 %s15, 1
        // Predicated region
        $region13: #{tpu_custom_call.1} parent=11 // pred_check
          %p140 = pneg %p48
        $region14: #{tpu_custom_call.1} parent=11 // pred_check_branch
          %142 = sbr.rel (%p140) target = $region16
        $region15: #{tpu_custom_call.1} parent=11 // pred_region
          _
        $region16: #{tpu_custom_call.1} parent=11 // pred_fallthru
          _
        // Predicated region
        $region17: #{tpu_custom_call.1} parent=11 // pred_check
          %p143 = pneg %p69
        $region18: #{tpu_custom_call.1} parent=11 // pred_check_branch
          %145 = sbr.rel (%p143) target = $region20
        $region19: #{tpu_custom_call.1} parent=11 // pred_region
          _
        $region20: #{tpu_custom_call.1} parent=11 // pred_fallthru
          _
      $region12: #{tpu_custom_call.1} parent=5 // pred_fallthru
        _
      %p146 = scmp.lt.s32.totalorder %s15, 2
      // Predicated region
      $region21: #{tpu_custom_call.1} parent=5 // pred_check
        %p147 = pneg %p146
      $region22: #{tpu_custom_call.1} parent=5 // pred_check_branch
        %149 = sbr.rel (%p147) target = $region24
      $region23: #{tpu_custom_call.1} parent=5 // pred_region
        // Predicated region
        $region25: #{tpu_custom_call.1} parent=23 // pred_check
          %p150 = pneg %p91
        $region26: #{tpu_custom_call.1} parent=23 // pred_check_branch
          %152 = sbr.rel (%p150) target = $region28
        $region27: #{tpu_custom_call.1} parent=23 // pred_region
          %s153 = sand.u32 %s81, 1
          %s154 = scalar_lea.sflag [#allocation3], %s153
          %s155 = sand.u32 %s81, 1
          %s156 = smul.addr %s155, 256
          %s157 = scalar_lea.vmem [#allocation2], %s156
          %s158 = smul.u32 2, %s23
          %s160 = ssub.s32 4096, 4096
          %161 = vsyncadd %s154, %s160
          %s162 = smul.addr %s22, 32
          %s163 = sadd.s32 %s158, %s162
          %s164 = smul.addr %s163, 128
          %s165 = scalar_lea.hbm %s2, %s164
          %s166 = sshll.u32 %s157, 4
          %s167 = int_to_ptr.vmem [resolvable:$true] %s166
          %172 = dma.hbm_to_vmem [thread:$0]  %s165, 4096, %s167, %s154, 256, 256, 16
        $region28: #{tpu_custom_call.1} parent=23 // pred_fallthru
          _
      $region24: #{tpu_custom_call.1} parent=5 // pred_fallthru
        _
      %p173 = scmp.le.s32.totalorder 1, %s15
      %p174 = scmp.lt.s32.totalorder %s15, 3
      %p175 = pnand %p173, %p174
      %p176 = pneg %p175
      // Predicated region
      $region29: #{tpu_custom_call.1} parent=5 // pred_check
        _
      $region30: #{tpu_custom_call.1} parent=5 // pred_check_branch
        %178 = sbr.rel (%p175) target = $region32
      $region31: #{tpu_custom_call.1} parent=5 // pred_region
        %s179 = ssub.s32 %s15, 1
        %s180 = sand.u32 %s84, 1
        %s181 = scalar_lea.sflag [#allocation3], %s180
        %s182 = sand.u32 %s84, 1
        %s183 = smul.addr %s182, 256
        %s184 = scalar_lea.vmem [#allocation2], %s183
        // Predicated region
        $region33: #{tpu_custom_call.1} parent=31 // pred_check
          %p185 = pneg %p97
        $region34: #{tpu_custom_call.1} parent=31 // pred_check_branch
          %187 = sbr.rel (%p185) target = $region36
        $region35: #{tpu_custom_call.1} parent=31 // pred_region
          %188 = dma.done %s181, 4096
        $region36: #{tpu_custom_call.1} parent=31 // pred_fallthru
          _
        %p189 = pneg %p48
        %p190 = pneg %p45
        %p191 = pneg %p69
        %p192 = pneg %p66
        %s193 = sand.u32 %s84, 1
        %s194 = scalar_lea.sflag [#allocation3], %s193
        %s195 = sand.u32 %s84, 1
        %s196 = smul.addr %s195, 256
        %s197 = scalar_lea.vmem [#allocation2], %s196
        %p198 = pneg %p97
        %p199 = pneg %p94
        %p200 = pneg %p125
        %p201 = pneg %p122
        %s202 = sand.u32 %s112, 1
        %s203 = scalar_lea.sflag [#allocation4], %s202
        %s204 = sand.u32 %s112, 1
        %s205 = smul.addr %s204, 48
        %s206 = scalar_lea.vmem [#allocation5], %s205
        %s207 = smul.u32 2, %s25
        %s208 = smul.u32 2, %s25
        %v209 = vld [vmem:[%s0] sm:$0xff]
        %v210 = vld [vmem:[%s0 + $0x8] sm:$0xff]
        %v211 = vld [vmem:[%s0 + $0x10] sm:$0xff]
        %v212 = vld [vmem:[%s184] sm:$0xff]
        %v213 = vld [vmem:[%s184 + $0x8] sm:$0xff]
        %v214 = vld [vmem:[%s184 + $0x10] sm:$0xff]
        %v215 = vld [vmem:[%s184 + $0x18] sm:$0xff]
        %v216 = vld [vmem:[%s184 + $0x20] sm:$0xff]
        %v217 = vld [vmem:[%s184 + $0x28] sm:$0xff]
        %v218 = vld [vmem:[%s184 + $0x30] sm:$0xff]
        %v219 = vld [vmem:[%s184 + $0x38] sm:$0xff]
        %v220 = vld [vmem:[%s184 + $0x40] sm:$0xff]
        %v221 = vld [vmem:[%s184 + $0x48] sm:$0xff]
        %v222 = vld [vmem:[%s184 + $0x50] sm:$0xff]
        %v223 = vld [vmem:[%s184 + $0x58] sm:$0xff]
        %v224 = vld [vmem:[%s184 + $0x60] sm:$0xff]
        %v225 = vld [vmem:[%s184 + $0x68] sm:$0xff]
        %v226 = vld [vmem:[%s184 + $0x70] sm:$0xff]
        %v227 = vld [vmem:[%s184 + $0x78] sm:$0xff]
        %v228 = vld [vmem:[%s184 + $0x80] sm:$0xff]
        %v229 = vld [vmem:[%s184 + $0x88] sm:$0xff]
        %v230 = vld [vmem:[%s184 + $0x90] sm:$0xff]
        %v231 = vld [vmem:[%s184 + $0x98] sm:$0xff]
        %v232 = vld [vmem:[%s184 + $0xa0] sm:$0xff]
        %v233 = vld [vmem:[%s184 + $0xa8] sm:$0xff]
        %v234 = vld [vmem:[%s184 + $0xb0] sm:$0xff]
        %v235 = vld [vmem:[%s184 + $0xb8] sm:$0xff]
        %v236 = vld [vmem:[%s184 + $0xc0] sm:$0xff]
        %v237 = vld [vmem:[%s184 + $0xc8] sm:$0xff]
        %v238 = vld [vmem:[%s184 + $0xd0] sm:$0xff]
        %v239 = vld [vmem:[%s184 + $0xd8] sm:$0xff]
        %v240 = vld [vmem:[%s184 + $0xe0] sm:$0xff]
        %v241 = vld [vmem:[%s184 + $0xe8] sm:$0xff]
        %v242 = vld [vmem:[%s184 + $0xf0] sm:$0xff]
        %v243 = vld [vmem:[%s184 + $0xf8] sm:$0xff]
        %v244 = vld [vmem:[%s1] sm:$0xff]
        %v245 = vld [vmem:[%s1 + $0x8] sm:$0xff]
        %v246 = vld [vmem:[%s1 + $0x10] sm:$0xff]
        %248 = vset.pattern.permute.xlu0 0
        %249 = vperm.xlu0 %248, %v244
        %v250 = vpop.permute.xlu0 %249
        %253 = vset.pattern.permute.xlu0 0
        %254 = vperm.xlu0 %253, %v245
        %v255 = vpop.permute.xlu0 %254
        %258 = vset.pattern.permute.xlu0 0
        %259 = vperm.xlu0 %258, %v246
        %v260 = vpop.permute.xlu0 %259
        %262 = vmatprep.subr.mxu0 %v243
        %263 = vmatpush1.msra.mxu0 %v242
        %264 = vmatprep.subr.mxu0 %v241
        %265 = vmatpush1.msra.mxu0 %v240
        %266 = vmatprep.subr.mxu0 %v239
        %267 = vmatpush1.msra.mxu0 %v238
        %268 = vmatprep.subr.mxu0 %v237
        %269 = vmatpush1.msra.mxu0 %v236
        %270 = vmatprep.subr.mxu0 %v235
        %271 = vmatpush1.msra.mxu0 %v234
        %272 = vmatprep.subr.mxu0 %v233
        %273 = vmatpush1.msra.mxu0 %v232
        %274 = vmatprep.subr.mxu0 %v231
        %275 = vmatpush1.msra.mxu0 %v230
        %276 = vmatprep.subr.mxu0 %v229
        %277 = vmatpush1.msra.mxu0 %v228
        %278 = vmatprep.subr.mxu0 %v227
        %279 = vmatpush1.msra.mxu0 %v226
        %280 = vmatprep.subr.mxu0 %v225
        %281 = vmatpush1.msra.mxu0 %v224
        %282 = vmatprep.subr.mxu0 %v223
        %283 = vmatpush1.msra.mxu0 %v222
        %284 = vmatprep.subr.mxu0 %v221
        %285 = vmatpush1.msra.mxu0 %v220
        %286 = vmatprep.subr.mxu0 %v219
        %287 = vmatpush1.msra.mxu0 %v218
        %288 = vmatprep.subr.mxu0 %v217
        %289 = vmatpush1.msra.mxu0 %v216
        %290 = vmatprep.subr.mxu0 %v215
        %291 = vmatpush1.msra.mxu0 %v214
        %292 = vmatprep.subr.mxu0 %v213
        %293 = vmatpush1.msra.mxu0 %v212
        %294 = vmatprep.subr.mxu0 0.0
        %295 = vmatpush2.msra.mxu0 0.0
        %296 = vmatprep.subr.mxu0 0.0
        %297 = vmatpush2.msra.mxu0 0.0
        %298 = vmatprep.subr.mxu0 0.0
        %299 = vmatpush2.msra.mxu0 0.0
        %300 = vmatprep.subr.mxu0 0.0
        %301 = vmatpush2.msra.mxu0 0.0
        %302 = vmatprep.subr.mxu0 0.0
        %303 = vmatpush2.msra.mxu0 0.0
        %304 = vmatprep.subr.mxu0 0.0
        %305 = vmatpush2.msra.mxu0 0.0
        %306 = vmatprep.subr.mxu0 0.0
        %307 = vmatpush2.msra.mxu0 0.0
        %308 = vmatprep.subr.mxu0 0.0
        %309 = vmatpush2.msra.mxu0 0.0
        %310 = vmatprep.subr.mxu0 0.0
        %311 = vmatpush2.msra.mxu0 0.0
        %312 = vmatprep.subr.mxu0 0.0
        %313 = vmatpush2.msra.mxu0 0.0
        %314 = vmatprep.subr.mxu0 0.0
        %315 = vmatpush2.msra.mxu0 0.0
        %316 = vmatprep.subr.mxu0 0.0
        %317 = vmatpush2.msra.mxu0 0.0
        %318 = vmatprep.subr.mxu0 0.0
        %319 = vmatpush2.msra.mxu0 0.0
        %320 = vmatprep.subr.mxu0 0.0
        %321 = vmatpush2.msra.mxu0 0.0
        %322 = vmatprep.subr.mxu0 0.0
        %323 = vmatpush2.msra.mxu0 0.0
        %324 = vmatprep.subr.mxu0 0.0
        %325 = vmatpush2.msra.mxu0 0.0
        %326 = vmatprep.mubr.f32.mxu0 0.0
        %327 = vmatmul.mubr.f32.gmra.mxu0 %v209
        %v328 = vpop.f32.mrf.mxu0
        %v329 = vadd.f32 %v250, %v328
        %v330 = vpop.f32.mrf.mxu0
        %v331 = vadd.f32 %v250, %v330
        %332 = vmatprep.mubr.f32.mxu0 0.0
        %333 = vmatmul.mubr.f32.gmra.mxu0 %v210
        %v334 = vpop.f32.mrf.mxu0
        %v335 = vadd.f32 %v255, %v334
        %v336 = vpop.f32.mrf.mxu0
        %v337 = vadd.f32 %v255, %v336
        %338 = vmatprep.mubr.f32.mxu0 0.0
        %339 = vmatmul.mubr.f32.gmra.mxu0 %v211
        %v340 = vpop.f32.mrf.mxu0
        %v341 = vadd.f32 %v260, %v340
        %v342 = vpop.f32.mrf.mxu0
        %v343 = vadd.f32 %v260, %v342
        %344 = vdwg.mxu0
        %345 = vst [vmem:[%s206] sm:$0xff] %v329
        %346 = vst [vmem:[%s206 + $0x8] sm:$0xff] %v331
        %347 = vst [vmem:[%s206 + $0x10] sm:$0xff] %v335
        %348 = vst [vmem:[%s206 + $0x18] sm:$0xff] %v337
        %349 = vst [vmem:[%s206 + $0x20] sm:$0xff] %v341
        %350 = vst [vmem:[%s206 + $0x28] sm:$0xff] %v343
        %s351 = sand.u32 %s112, 1
        %s352 = scalar_lea.sflag [#allocation4], %s351
        %s353 = sand.u32 %s112, 1
        %s354 = smul.addr %s353, 48
        %s355 = scalar_lea.vmem [#allocation5], %s354
        // Predicated region
        $region37: #{tpu_custom_call.1} parent=31 // pred_check
          %p356 = pneg %p122
        $region38: #{tpu_custom_call.1} parent=31 // pred_check_branch
          %358 = sbr.rel (%p356) target = $region40
        $region39: #{tpu_custom_call.1} parent=31 // pred_region
          %s359 = smul.u32 2, %s25
          %s361 = ssub.s32 768, 768
          %362 = vsyncadd %s352, %s361
          %s363 = smul.addr %s24, 6
          %s364 = sadd.s32 %s359, %s363
          %s365 = smul.addr %s364, 128
          %s366 = scalar_lea.hbm %s3, %s365
          %s367 = sshll.u32 %s355, 4
          %s368 = int_to_ptr.vmem [resolvable:$true] %s367
          %373 = dma.vmem_to_hbm [thread:$0]  %s368, 768, %s366, %s352, 256, 256, 16
        $region40: #{tpu_custom_call.1} parent=31 // pred_fallthru
          _
      $region32: #{tpu_custom_call.1} parent=5 // pred_fallthru
        _
      %p374 = scmp.le.s32.totalorder 2, %s15
      // Predicated region
      $region41: #{tpu_custom_call.1} parent=5 // pred_check
        %p375 = pneg %p374
      $region42: #{tpu_custom_call.1} parent=5 // pred_check_branch
        %377 = sbr.rel (%p375) target = $region44
      $region43: #{tpu_custom_call.1} parent=5 // pred_region
        %s378 = ssub.s32 %s15, 2
        // Predicated region
        $region45: #{tpu_custom_call.1} parent=43 // pred_check
          %p379 = pneg %p128
        $region46: #{tpu_custom_call.1} parent=43 // pred_check_branch
          %381 = sbr.rel (%p379) target = $region48
        $region47: #{tpu_custom_call.1} parent=43 // pred_region
          %s382 = sand.u32 %s113, 1
          %s383 = scalar_lea.sflag [#allocation4], %s382
          %s384 = sand.u32 %s113, 1
          %s385 = smul.addr %s384, 48
          %s386 = scalar_lea.vmem [#allocation5], %s385
          %387 = dma.done %s383, 768
        $region48: #{tpu_custom_call.1} parent=43 // pred_fallthru
          _
      $region44: #{tpu_custom_call.1} parent=5 // pred_fallthru
        _
    $region6: #{tpu_custom_call.1} parent=1 // loop_footer
      %s19 = sadd.s32 1, %s15
    $region7: #{tpu_custom_call.1} parent=1 // loop_footer_branch
      %14 = sbr.rel target = $region3
    $region8: #{tpu_custom_call.1} parent=1 // loop_exit
      _
    %388 = vsyncpa [#allocation3], 1
    %s389 = scalar_lea.sflag [#allocation3], 1
    %390 = vsyncpa %s389, 1
    %391 = vsyncpa [#allocation4], 1
    %s392 = scalar_lea.sflag [#allocation4], 1
    %393 = vsyncpa %s392, 1

</llo_original>
